<compile_context>
chip_gen: v7x
topology: tpu7x:2x2x1
jax: 0.10.0
libtpu: 0.0.40
codegen_flags: <defaults>
</compile_context>

<pallas_src>
import functools
import math

import jax
import jax.numpy as jnp
from jax import lax
from jax.experimental import pallas as pl
from jax.experimental.pallas import tpu as pltpu


def _round_up(x, m):
    return (x + m - 1) // m * m


def _vmem_limit_bytes(row_tile, vocab_tile, E, matmul_dtype, out_dtype):
    """Double-buffered tile footprint + headroom, capped for v7x's 64 MiB."""
    msz = jnp.dtype(matmul_dtype).itemsize
    osz = jnp.dtype(out_dtype).itemsize
    dbuf = 2 * (row_tile * E * msz          # x row tile
                + E * E * msz               # dense weight (resident)
                + E * vocab_tile * msz      # proj weight tile
                + (3 * E + vocab_tile) * 4  # small 1-D params
                + row_tile * vocab_tile * osz)  # out tile
    scratch = row_tile * E * msz            # h scratch
    budget = dbuf + scratch + (8 << 20)     # compiler / spill headroom
    return int(min(max(budget, 32 << 20), 56 << 20))


def _lm_head_kernel(x_ref, dwT_ref, db_ref, lnw_ref, lnb_ref, pwT_ref, pb_ref,
                    out_ref, h_ref, *, approximate_gelu):
    # Stage 1 (once per row tile): h = LayerNorm(gelu(x @ dense_wT + b))
    @pl.when(pl.program_id(1) == 0)
    def _():
        h = jnp.dot(x_ref[...], dwT_ref[...],
                    preferred_element_type=jnp.float32)
        h = h + db_ref[...]
        if approximate_gelu:
            # tanh GELU -> EUP (its own VLIW slot); small delta vs torch erf GELU.
            h = 0.5 * h * (1.0 + jnp.tanh(
                0.7978845608028654 * (h + 0.044715 * h * h * h)))
        else:
            # exact erf GELU (torch.nn.functional.gelu default)
            h = 0.5 * h * (1.0 + lax.erf(h * 0.7071067811865476))
        # LayerNorm over embed dim (eps=1e-5), single-pass statistics.
        mu = jnp.mean(h, axis=-1, keepdims=True)
        var = jnp.maximum(
            jnp.mean(h * h, axis=-1, keepdims=True) - mu * mu, 0.0)
        h = (h - mu) * lax.rsqrt(var + 1e-5)
        h = h * lnw_ref[...] + lnb_ref[...]
        h_ref[...] = h.astype(h_ref.dtype)

    # Stage 2 (every (i, j)): logits tile = h @ proj_wT tile + bias tile
    out_ref[...] = (
        jnp.dot(h_ref[...], pwT_ref[...], preferred_element_type=jnp.float32)
        + pb_ref[...]
    ).astype(out_ref.dtype)


def prepare_lm_head_params(dense_w, dense_b, ln_w, ln_b, proj_w, proj_b, *,
                           vocab_tile=1024, matmul_dtype=jnp.bfloat16):
    """One-time weight prep (cast -> transpose -> pad); reuse across calls."""
    E = dense_w.shape[0]
    V = proj_w.shape[0]
    vocab_tile = min(vocab_tile, _round_up(V, 128))
    V_pad = _round_up(V, vocab_tile)

    # Cast BEFORE padding (halves pad traffic); pre-transpose to [K, N] so the
    # kernel runs plain matmuls with vocab on lanes.
    dwT = dense_w.astype(matmul_dtype).T                 # [E(in), E(out)]
    pwT = proj_w.astype(matmul_dtype).T                  # [E, V]
    pb = proj_b.astype(jnp.float32)
    if V_pad != V:
        pwT = jnp.pad(pwT, ((0, 0), (0, V_pad - V)))
        pb = jnp.pad(pb, (0, V_pad - V))

    return dict(
        dwT=dwT,
        db=dense_b.reshape(1, E).astype(jnp.float32),
        lnw=ln_w.reshape(1, E).astype(jnp.float32),
        lnb=ln_b.reshape(1, E).astype(jnp.float32),
        pwT=pwT,
        pb=pb.reshape(1, V_pad),
        V=V,
        vocab_tile=vocab_tile,
    )


def roberta_lm_head_apply(features, params, *, row_tile=512,
                          out_dtype=jnp.bfloat16, approximate_gelu=True,
                          trim_output=True):
    """features: [B, T, E] -> logits: [B, T, V] (or padded [N_pad, V_pad])."""
    B, T, E = features.shape
    assert params["dwT"].shape[0] == E
    N = B * T
    matmul_dtype = params["dwT"].dtype
    vocab_tile = params["vocab_tile"]
    V = params["V"]
    V_pad = params["pwT"].shape[1]

    # Row granularity: bf16 packs 2 rows/sublane -> use 16; f32 -> 8.
    row_gran = 8 if matmul_dtype == jnp.float32 else 16
    row_tile = max(row_gran, min(row_tile, _round_up(N, row_gran)))
    N_pad = _round_up(N, row_tile)

    x = features.reshape(N, E).astype(matmul_dtype)
    if N_pad != N:
        x = jnp.pad(x, ((0, N_pad - N), (0, 0)))

    n_rt = N_pad // row_tile
    n_vt = V_pad // vocab_tile

    kernel = functools.partial(_lm_head_kernel,
                               approximate_gelu=approximate_gelu)
    vmem_limit = _vmem_limit_bytes(row_tile, vocab_tile, E,
                                   matmul_dtype, out_dtype)

    logits = pl.pallas_call(
        kernel,
        out_shape=jax.ShapeDtypeStruct((N_pad, V_pad), out_dtype),
        grid_spec=pltpu.PrefetchScalarGridSpec(
            num_scalar_prefetch=0,
            grid=(n_rt, n_vt),
            in_specs=[
                pl.BlockSpec((row_tile, E), lambda i, j: (i, 0)),      # x rows
                pl.BlockSpec((E, E), lambda i, j: (0, 0)),             # dense w.T
                pl.BlockSpec((1, E), lambda i, j: (0, 0)),             # dense b
                pl.BlockSpec((1, E), lambda i, j: (0, 0)),             # LN w
                pl.BlockSpec((1, E), lambda i, j: (0, 0)),             # LN b
                pl.BlockSpec((E, vocab_tile), lambda i, j: (0, j)),    # proj w.T
                pl.BlockSpec((1, vocab_tile), lambda i, j: (0, j)),    # proj b
            ],
            out_specs=pl.BlockSpec((row_tile, vocab_tile),
                                   lambda i, j: (i, j)),
            scratch_shapes=[pltpu.VMEM((row_tile, E), matmul_dtype)],
        ),
        compiler_params=pltpu.CompilerParams(
            dimension_semantics=("parallel", "arbitrary"),
            vmem_limit_bytes=vmem_limit),
    )(x, params["dwT"], params["db"], params["lnw"], params["lnb"],
      params["pwT"], params["pb"])

    if trim_output:
        # TODO(synk): for very large V prefer trim_output=False (mask padded
        # vocab downstream) to avoid this full-array slice copy.
        return logits[:N, :V].reshape(B, T, V)
    return logits


def roberta_lm_head(features, dense_w, dense_b, ln_w, ln_b, proj_w, proj_b,
                    **kwargs):
    """Convenience wrapper (prepares weights per call; prefer prepare+apply)."""
    prep_kw = {k: kwargs.pop(k) for k in ("vocab_tile", "matmul_dtype")
               if k in kwargs}
    params = prepare_lm_head_params(dense_w, dense_b, ln_w, ln_b,
                                    proj_w, proj_b, **prep_kw)
    return roberta_lm_head_apply(features, params, **kwargs)


def _reference(features, dense_w, dense_b, ln_w, ln_b, proj_w, proj_b, *,
               approximate_gelu):
    x = features.reshape(-1, features.shape[-1]).astype(jnp.float32)
    h = x @ dense_w.T + dense_b
    if approximate_gelu:
        h = 0.5 * h * (1.0 + jnp.tanh(
            0.7978845608028654 * (h + 0.044715 * h ** 3)))
    else:
        h = 0.5 * h * (1.0 + lax.erf(h * 0.7071067811865476))
    mu = h.mean(-1, keepdims=True)
    var = ((h - mu) ** 2).mean(-1, keepdims=True)
    h = (h - mu) * lax.rsqrt(var + 1e-5) * ln_w + ln_b
    out = h @ proj_w.T + proj_b
    return out.reshape(features.shape[:-1] + (proj_w.shape[0],))


if __name__ == "__main__":
    # Small shapes consistent with the module: batch=2, seq=8, embed_dim=32,
    # output_dim (vocab) = 300 (not a multiple of 128 -> exercises padding).
    B, T, E, V = 2, 8, 32, 300

    key = jax.random.PRNGKey(0)
    k = jax.random.split(key, 4)

    features = jax.random.normal(k[0], (B, T, E), dtype=jnp.float32)

    bound_e = 1.0 / math.sqrt(E)
    dense_w = jax.random.uniform(k[1], (E, E), jnp.float32, -bound_e, bound_e)
    dense_b = jax.random.uniform(k[2], (E,), jnp.float32, -bound_e, bound_e)
    ln_w = jnp.ones((E,), jnp.float32)
    ln_b = jnp.zeros((E,), jnp.float32)
    proj_w = jax.random.uniform(k[3], (V, E), jnp.float32, -bound_e, bound_e)
    proj_b = jnp.zeros((V,), jnp.float32)  # self.bias = zeros(output_dim)

    # 1) f32 MXU operands, exact erf GELU, small tiles -> multi-tile grid,
    #    tight check against the f32 reference.
    params_f32 = prepare_lm_head_params(
        dense_w, dense_b, ln_w, ln_b, proj_w, proj_b,
        vocab_tile=128, matmul_dtype=jnp.float32)
    logits_f32 = roberta_lm_head_apply(
        features, params_f32, row_tile=8, out_dtype=jnp.float32,
        approximate_gelu=False)
    jax.block_until_ready(logits_f32)
    ref_exact = _reference(features, dense_w, dense_b, ln_w, ln_b,
                           proj_w, proj_b, approximate_gelu=False)
    assert logits_f32.shape == (B, T, V)
    assert jnp.allclose(logits_f32, ref_exact, atol=1e-3, rtol=1e-3), \
        "f32 kernel mismatch"

    # 2) Default fast path: bf16 MXU operands, tanh GELU, bf16 logits,
    #    default (clamped) large tiles -> loose check.
    params_fast = prepare_lm_head_params(
        dense_w, dense_b, ln_w, ln_b, proj_w, proj_b)
    logits_bf16 = roberta_lm_head_apply(features, params_fast)
    jax.block_until_ready(logits_bf16)
    ref_tanh = _reference(features, dense_w, dense_b, ln_w, ln_b,
                          proj_w, proj_b, approximate_gelu=True)
    assert logits_bf16.shape == (B, T, V)
    assert jnp.allclose(logits_bf16.astype(jnp.float32), ref_tanh,
                        atol=1e-1, rtol=1e-1), "bf16 kernel mismatch"

    print("KERNEL_OK")
</pallas_src>

<mosaic_0001>
module attributes {stable_mosaic.version = 11 : i64} {
  func.func @_lm_head_kernel(%arg0: i32, %arg1: i32, %arg2: memref<8x32xf32, #tpu.memory_space<vmem>>, %arg3: memref<32x32xf32, #tpu.memory_space<vmem>>, %arg4: memref<1x32xf32, #tpu.memory_space<vmem>>, %arg5: memref<1x32xf32, #tpu.memory_space<vmem>>, %arg6: memref<1x32xf32, #tpu.memory_space<vmem>>, %arg7: memref<32x128xf32, #tpu.memory_space<vmem>>, %arg8: memref<1x128xf32, #tpu.memory_space<vmem>>, %arg9: memref<8x128xf32, #tpu.memory_space<vmem>>, %arg10: memref<8x32xf32, #tpu.memory_space<vmem>>) attributes {dimension_semantics = [#tpu.dimension_semantics<parallel>, #tpu.dimension_semantics<arbitrary>], iteration_bounds = array<i64: 2, 3>, scalar_prefetch = 0 : i64, scratch_operands = 1 : i64, tpu.core_type = #tpu.core_type<tc>, window_params = [{transform_indices = @transform_0, window_bounds = array<i64: 8, 32>}, {pipeline_mode = #tpu.pipeline_mode<synchronous>, transform_indices = @transform_1, window_bounds = array<i64: 32, 32>}, {pipeline_mode = #tpu.pipeline_mode<synchronous>, transform_indices = @transform_2, window_bounds = array<i64: 1, 32>}, {pipeline_mode = #tpu.pipeline_mode<synchronous>, transform_indices = @transform_3, window_bounds = array<i64: 1, 32>}, {pipeline_mode = #tpu.pipeline_mode<synchronous>, transform_indices = @transform_4, window_bounds = array<i64: 1, 32>}, {transform_indices = @transform_5, window_bounds = array<i64: 32, 128>}, {transform_indices = @transform_6, window_bounds = array<i64: 1, 128>}, {transform_indices = @transform_7, window_bounds = array<i64: 8, 128>}]} {
    %c0_i32 = arith.constant 0 : i32
    %0 = arith.cmpi eq, %arg1, %c0_i32 : i32
    %1 = arith.extui %0 : i1 to i32
    %c0_i32_0 = arith.constant 0 : i32
    %2 = arith.cmpi ne, %1, %c0_i32_0 : i32
    scf.if %2 {
      %c0_8 = arith.constant 0 : index
      %c0_9 = arith.constant 0 : index
      %10 = vector.load %arg2[%c0_8, %c0_9] : memref<8x32xf32, #tpu.memory_space<vmem>>, vector<8x32xf32>
      %c0_10 = arith.constant 0 : index
      %c0_11 = arith.constant 0 : index
      %11 = vector.load %arg3[%c0_10, %c0_11] : memref<32x32xf32, #tpu.memory_space<vmem>>, vector<32x32xf32>
      %cst_12 = arith.constant dense<0.000000e+00> : vector<8x32xf32>
      %12 = tpu.matmul %10, %11, %cst_12 {dimension_numbers = #tpu.dot_dimension_numbers<[1], [0], [0], [1], [0, 0, 1, 1], [], []>} : vector<8x32xf32>, vector<32x32xf32>, vector<8x32xf32> -> vector<8x32xf32>
      %c0_13 = arith.constant 0 : index
      %c0_14 = arith.constant 0 : index
      %13 = vector.load %arg4[%c0_13, %c0_14] : memref<1x32xf32, #tpu.memory_space<vmem>>, vector<1x32xf32>
      %14 = vector.broadcast %13 : vector<1x32xf32> to vector<8x32xf32>
      %15 = arith.addf %12, %14 : vector<8x32xf32>
      %cst_15 = arith.constant 5.000000e-01 : f32
      %16 = vector.broadcast %cst_15 : f32 to vector<8x32xf32>
      %17 = arith.mulf %16, %15 : vector<8x32xf32>
      %cst_16 = arith.constant 0.707106769 : f32
      %18 = vector.broadcast %cst_16 : f32 to vector<8x32xf32>
      %19 = arith.mulf %15, %18 : vector<8x32xf32>
      %20 = math.erf %19 : vector<8x32xf32>
      %cst_17 = arith.constant 1.000000e+00 : f32
      %21 = vector.broadcast %cst_17 : f32 to vector<8x32xf32>
      %22 = arith.addf %21, %20 : vector<8x32xf32>
      %23 = arith.mulf %17, %22 : vector<8x32xf32>
      %cst_18 = arith.constant dense<0.000000e+00> : vector<8xf32>
      %24 = vector.multi_reduction <add>, %23, %cst_18 [1] : vector<8x32xf32> to vector<8xf32>
      %25 = vector.shape_cast %24 : vector<8xf32> to vector<8x1xf32>
      %cst_19 = arith.constant 3.200000e+01 : f32
      %26 = vector.broadcast %cst_19 : f32 to vector<8x1xf32>
      %27 = arith.divf %25, %26 : vector<8x1xf32>
      %28 = arith.mulf %23, %23 : vector<8x32xf32>
      %cst_20 = arith.constant dense<0.000000e+00> : vector<8xf32>
      %29 = vector.multi_reduction <add>, %28, %cst_20 [1] : vector<8x32xf32> to vector<8xf32>
      %30 = vector.shape_cast %29 : vector<8xf32> to vector<8x1xf32>
      %cst_21 = arith.constant 3.200000e+01 : f32
      %31 = vector.broadcast %cst_21 : f32 to vector<8x1xf32>
      %32 = arith.divf %30, %31 : vector<8x1xf32>
      %33 = arith.mulf %27, %27 : vector<8x1xf32>
      %34 = arith.subf %32, %33 : vector<8x1xf32>
      %cst_22 = arith.constant 0.000000e+00 : f32
      %35 = vector.broadcast %cst_22 : f32 to vector<8x1xf32>
      %36 = arith.maximumf %34, %35 : vector<8x1xf32>
      %37 = vector.broadcast %27 : vector<8x1xf32> to vector<8x32xf32>
      %38 = arith.subf %23, %37 : vector<8x32xf32>
      %cst_23 = arith.constant 9.99999974E-6 : f32
      %39 = vector.broadcast %cst_23 : f32 to vector<8x1xf32>
      %40 = arith.addf %36, %39 : vector<8x1xf32>
      %41 = math.rsqrt %40 : vector<8x1xf32>
      %42 = vector.broadcast %41 : vector<8x1xf32> to vector<8x32xf32>
      %43 = arith.mulf %38, %42 : vector<8x32xf32>
      %c0_24 = arith.constant 0 : index
      %c0_25 = arith.constant 0 : index
      %44 = vector.load %arg5[%c0_24, %c0_25] : memref<1x32xf32, #tpu.memory_space<vmem>>, vector<1x32xf32>
      %45 = vector.broadcast %44 : vector<1x32xf32> to vector<8x32xf32>
      %46 = arith.mulf %43, %45 : vector<8x32xf32>
      %c0_26 = arith.constant 0 : index
      %c0_27 = arith.constant 0 : index
      %47 = vector.load %arg6[%c0_26, %c0_27] : memref<1x32xf32, #tpu.memory_space<vmem>>, vector<1x32xf32>
      %48 = vector.broadcast %47 : vector<1x32xf32> to vector<8x32xf32>
      %49 = arith.addf %46, %48 : vector<8x32xf32>
      %c0_28 = arith.constant 0 : index
      %c0_29 = arith.constant 0 : index
      %50 = vector.load %arg10[%c0_28, %c0_29] : memref<8x32xf32, #tpu.memory_space<vmem>>, vector<8x32xf32>
      tpu.vector_store %arg10[%c0_28, %c0_29], %49 {strides = array<i32>} : memref<8x32xf32, #tpu.memory_space<vmem>>, vector<8x32xf32>,
    } else {
    }
    %c0 = arith.constant 0 : index
    %c0_1 = arith.constant 0 : index
    %3 = vector.load %arg10[%c0, %c0_1] : memref<8x32xf32, #tpu.memory_space<vmem>>, vector<8x32xf32>
    %c0_2 = arith.constant 0 : index
    %c0_3 = arith.constant 0 : index
    %4 = vector.load %arg7[%c0_2, %c0_3] : memref<32x128xf32, #tpu.memory_space<vmem>>, vector<32x128xf32>
    %cst = arith.constant dense<0.000000e+00> : vector<8x128xf32>
    %5 = tpu.matmul %3, %4, %cst {dimension_numbers = #tpu.dot_dimension_numbers<[1], [0], [0], [1], [0, 0, 1, 1], [], []>} : vector<8x32xf32>, vector<32x128xf32>, vector<8x128xf32> -> vector<8x128xf32>
    %c0_4 = arith.constant 0 : index
    %c0_5 = arith.constant 0 : index
    %6 = vector.load %arg8[%c0_4, %c0_5] : memref<1x128xf32, #tpu.memory_space<vmem>>, vector<1x128xf32>
    %7 = vector.broadcast %6 : vector<1x128xf32> to vector<8x128xf32>
    %8 = arith.addf %5, %7 : vector<8x128xf32>
    %c0_6 = arith.constant 0 : index
    %c0_7 = arith.constant 0 : index
    %9 = vector.load %arg9[%c0_6, %c0_7] : memref<8x128xf32, #tpu.memory_space<vmem>>, vector<8x128xf32>
    tpu.vector_store %arg9[%c0_6, %c0_7], %8 {strides = array<i32>} : memref<8x128xf32, #tpu.memory_space<vmem>>, vector<8x128xf32>,
    return
  }
  func.func @transform_0(%arg0: i32, %arg1: i32) -> (i32, i32) {
    %c0_i32 = arith.constant 0 : i32
    %c0_i32_0 = arith.constant 0 : i32
    return %arg0, %c0_i32 : i32, i32
  }
  func.func @transform_1(%arg0: i32, %arg1: i32) -> (i32, i32) {
    %c0_i32 = arith.constant 0 : i32
    %c0_i32_0 = arith.constant 0 : i32
    %c0_i32_1 = arith.constant 0 : i32
    return %c0_i32, %c0_i32_0 : i32, i32
  }
  func.func @transform_2(%arg0: i32, %arg1: i32) -> (i32, i32) {
    %c0_i32 = arith.constant 0 : i32
    %c0_i32_0 = arith.constant 0 : i32
    %c0_i32_1 = arith.constant 0 : i32
    return %c0_i32, %c0_i32_0 : i32, i32
  }
  func.func @transform_3(%arg0: i32, %arg1: i32) -> (i32, i32) {
    %c0_i32 = arith.constant 0 : i32
    %c0_i32_0 = arith.constant 0 : i32
    %c0_i32_1 = arith.constant 0 : i32
    return %c0_i32, %c0_i32_0 : i32, i32
  }
  func.func @transform_4(%arg0: i32, %arg1: i32) -> (i32, i32) {
    %c0_i32 = arith.constant 0 : i32
    %c0_i32_0 = arith.constant 0 : i32
    %c0_i32_1 = arith.constant 0 : i32
    return %c0_i32, %c0_i32_0 : i32, i32
  }
  func.func @transform_5(%arg0: i32, %arg1: i32) -> (i32, i32) {
    %c0_i32 = arith.constant 0 : i32
    %c0_i32_0 = arith.constant 0 : i32
    return %c0_i32, %arg1 : i32, i32
  }
  func.func @transform_6(%arg0: i32, %arg1: i32) -> (i32, i32) {
    %c0_i32 = arith.constant 0 : i32
    %c0_i32_0 = arith.constant 0 : i32
    return %c0_i32, %arg1 : i32, i32
  }
  func.func @transform_7(%arg0: i32, %arg1: i32) -> (i32, i32) {
    %c0_i32 = arith.constant 0 : i32
    return %arg0, %arg1 : i32, i32
  }
}

</mosaic_0001>

<llo_original>
// kernel: tpu_custom_call.1
$region0: #{tpu_custom_call.1}
  #allocation0 [shape = 'u32[]', space=smem, size = 0x4, offset = 0x4, fixed_abs, tag = 'smem constant byte address 0x4 - core index']
  #allocation1 [shape = 'u32[144,128]{1,0:T(1,128)}', space=vmem, size = 0x12000, scoped, tag = 'internal scratch']
  #allocation2 [shape = 'f32[8,32]{1,0:T(8,128)}', space=vmem, size = 0x1000, scoped, tag = 'scratch operand']
  %s0 = inlined_call_operand.hbm [shape: f32[16,32], index: 0, kind: input, shape index: {}]
  %s1 = inlined_call_operand.hbm [shape: f32[32,32], index: 1, kind: input, shape index: {}]
  %s2 = inlined_call_operand.vmem [shape: f32[1,32], index: 2, kind: input, shape index: {}]
  %s3 = inlined_call_operand.vmem [shape: f32[1,32], index: 3, kind: input, shape index: {}]
  %s4 = inlined_call_operand.vmem [shape: f32[1,32], index: 4, kind: input, shape index: {}]
  %s5 = inlined_call_operand.hbm [shape: f32[32,384], index: 5, kind: input, shape index: {}]
  %s6 = inlined_call_operand.vmem [shape: f32[1,384], index: 6, kind: input, shape index: {}]
  %s7 = inlined_call_operand.hbm [shape: f32[16,384], index: 7, kind: output, shape index: {}]
  %s8 = sld [smem:[#allocation0]]
  $region77: #{tpu_custom_call.1} parent=0
    _
  %s10 = ssub.s32 1, %s8
  %s11 = scalar_select 0, %s10, %s8
  $region1: #{tpu_custom_call.1} parent=0
    #allocation3 [shape = 'u8[8192]{0}', space=vmem, size = 0x2000, scoped, tag = 'input window, operand 0']
    #allocation4 [shape = 's32[2]{0}', space=sflag, size = 0x8, scoped, tag = 'scoped memory for tpu_custom_call.1']
    #allocation5 [shape = 's32[2]{0}', space=sflag, size = 0x8, scoped, tag = 'scoped memory for tpu_custom_call.1']
    #allocation6 [shape = 'u8[16384]{0}', space=vmem, size = 0x4000, scoped, tag = 'input window, operand 1, single buffered']
    #allocation7 [shape = 's32[1]{0}', space=sflag, size = 0x4, scoped, tag = 'scoped memory for tpu_custom_call.1']
    #allocation8 [shape = 'u8[32768]{0}', space=vmem, size = 0x8000, scoped, tag = 'input window, operand 5']
    #allocation9 [shape = 'u8[8192]{0}', space=vmem, size = 0x2000, scoped, tag = 'output window, operand 0']
    %12 = vsyncpa [#allocation4], 0
    %s13 = scalar_lea.sflag [#allocation4], 1
    %14 = vsyncpa %s13, 0
    %15 = vsyncpa [#allocation7], 0
    %16 = vsyncpa [#allocation5], 0
    %s17 = scalar_lea.sflag [#allocation5], 1
    %18 = vsyncpa %s17, 0
    loop: start=0, step=1, limit=8
    $region2: #{tpu_custom_call.1} parent=1 // loop_pre_header
      _
    $region3: #{tpu_custom_call.1} parent=1 // loop_header
      %s20 = sphi 0, %s24
      %p21 = scmp.ge.s32.totalorder %s20, 8
      %s27 = sphi 0, %s39
      %s28 = sphi 0, %s35
      %s29 = sphi 0, %s27
      %s30 = sphi 0, %s28
      %s31 = sphi 0, %s29
      %s32 = sphi 0, %s30
      %s42 = sphi 0, %s44
      %s45 = sphi 0, %s42
      %s46 = sphi 0, %s45
      %s62 = sphi 0, %s46
      %s66 = sphi 0, %s66
      %s68 = sphi 0, %s66
      %s69 = sphi 0, %s68
      %s83 = sphi 0, %s69
      %s87 = sphi 0, %s87
      %s89 = sphi 0, %s87
      %s90 = sphi 0, %s89
      %s104 = sphi 0, %s90
      %s108 = sphi 0, %s108
      %s110 = sphi 0, %s108
      %s111 = sphi 0, %s110
      %s125 = sphi 0, %s111
      %s129 = sphi 0, %s129
      %s131 = sphi 0, %s129
      %s132 = sphi 0, %s131
      %s146 = sphi 0, %s132
      %s152 = sphi 0, %s154
      %s155 = sphi 0, %s152
      %s156 = sphi 0, %s155
      %s172 = sphi 0, %s156
      %s178 = sphi 0, %s180
      %s181 = sphi 0, %s178
      %s182 = sphi 0, %s181
      %s198 = sphi 0, %s182
      %s206 = sphi 0, %s208
      %s209 = sphi 0, %s206
      %s210 = sphi 0, %s209
      %s226 = sphi 0, %s210
    $region4: #{tpu_custom_call.1} parent=1 // loop_header_branch
      %23 = sbr.rel (%p21) target = $region8
    $region5: #{tpu_custom_call.1} parent=1 // loop_body
      %s25 = ssub.s32 %s20, 1
      %s26 = ssub.s32 %s20, 2
      %s33 = sadd.s32 1, %s28
      %p34 = scmp.ge.s32.totalorder %s33, 3
      %s35 = scalar_select %p34, 0, %s33
      %s36 = sadd.s32 1, %s27
      %s37 = scalar_select %p34, %s36, %s27
      %p38 = scmp.ge.s32.totalorder %s37, 2
      %s39 = scalar_select %p38, 0, %s37
      %s40 = ssub.s32 %s27, %s39
      %p41 = scmp.eq.s32.totalorder %s40, 0
      %s43 = sadd.s32 %s42, 1
      %s44 = scalar_select %p41, %s42, %s43
      %p47 = pneg %p41
      %p48 = scmp.eq.s32.totalorder %s20, 5
      %p49 = por %p47, %p48
      %p50 = scmp.ne.s32.totalorder %s42, %s45
      %p51 = scmp.eq.s32.totalorder %s20, 0
      %p52 = por %p50, %p51
      %p53 = scmp.ne.s32.totalorder %s42, %s45
      %p54 = scmp.eq.s32.totalorder %s25, 5
      %p55 = por %p53, %p54
      %p56 = scmp.ne.s32.totalorder %s45, %s46
      %p57 = scmp.eq.s32.totalorder %s25, 0
      %p58 = por %p56, %p57
      %p59 = scmp.ne.s32.totalorder %s45, %s46
      %p60 = scmp.eq.s32.totalorder %s26, 5
      %p61 = por %p59, %p60
      %p63 = scmp.ne.s32.totalorder %s46, %s62
      %p64 = scmp.eq.s32.totalorder %s26, 0
      %p65 = por %p63, %p64
      %s67 = sadd.s32 %s66, 1
      %p70 = scmp.eq.s32.totalorder %s20, 5
      %p71 = scmp.ne.s32.totalorder %s66, %s68
      %p72 = scmp.eq.s32.totalorder %s20, 0
      %p73 = por %p71, %p72
      %p74 = scmp.ne.s32.totalorder %s66, %s68
      %p75 = scmp.eq.s32.totalorder %s25, 5
      %p76 = por %p74, %p75
      %p77 = scmp.ne.s32.totalorder %s68, %s69
      %p78 = scmp.eq.s32.totalorder %s25, 0
      %p79 = por %p77, %p78
      %p80 = scmp.ne.s32.totalorder %s68, %s69
      %p81 = scmp.eq.s32.totalorder %s26, 5
      %p82 = por %p80, %p81
      %p84 = scmp.ne.s32.totalorder %s69, %s83
      %p85 = scmp.eq.s32.totalorder %s26, 0
      %p86 = por %p84, %p85
      %s88 = sadd.s32 %s87, 1
      %p91 = scmp.eq.s32.totalorder %s20, 5
      %p92 = scmp.ne.s32.totalorder %s87, %s89
      %p93 = scmp.eq.s32.totalorder %s20, 0
      %p94 = por %p92, %p93
      %p95 = scmp.ne.s32.totalorder %s87, %s89
      %p96 = scmp.eq.s32.totalorder %s25, 5
      %p97 = por %p95, %p96
      %p98 = scmp.ne.s32.totalorder %s89, %s90
      %p99 = scmp.eq.s32.totalorder %s25, 0
      %p100 = por %p98, %p99
      %p101 = scmp.ne.s32.totalorder %s89, %s90
      %p102 = scmp.eq.s32.totalorder %s26, 5
      %p103 = por %p101, %p102
      %p105 = scmp.ne.s32.totalorder %s90, %s104
      %p106 = scmp.eq.s32.totalorder %s26, 0
      %p107 = por %p105, %p106
      %s109 = sadd.s32 %s108, 1
      %p112 = scmp.eq.s32.totalorder %s20, 5
      %p113 = scmp.ne.s32.totalorder %s108, %s110
      %p114 = scmp.eq.s32.totalorder %s20, 0
      %p115 = por %p113, %p114
      %p116 = scmp.ne.s32.totalorder %s108, %s110
      %p117 = scmp.eq.s32.totalorder %s25, 5
      %p118 = por %p116, %p117
      %p119 = scmp.ne.s32.totalorder %s110, %s111
      %p120 = scmp.eq.s32.totalorder %s25, 0
      %p121 = por %p119, %p120
      %p122 = scmp.ne.s32.totalorder %s110, %s111
      %p123 = scmp.eq.s32.totalorder %s26, 5
      %p124 = por %p122, %p123
      %p126 = scmp.ne.s32.totalorder %s111, %s125
      %p127 = scmp.eq.s32.totalorder %s26, 0
      %p128 = por %p126, %p127
      %s130 = sadd.s32 %s129, 1
      %p133 = scmp.eq.s32.totalorder %s20, 5
      %p134 = scmp.ne.s32.totalorder %s129, %s131
      %p135 = scmp.eq.s32.totalorder %s20, 0
      %p136 = por %p134, %p135
      %p137 = scmp.ne.s32.totalorder %s129, %s131
      %p138 = scmp.eq.s32.totalorder %s25, 5
      %p139 = por %p137, %p138
      %p140 = scmp.ne.s32.totalorder %s131, %s132
      %p141 = scmp.eq.s32.totalorder %s25, 0
      %p142 = por %p140, %p141
      %p143 = scmp.ne.s32.totalorder %s131, %s132
      %p144 = scmp.eq.s32.totalorder %s26, 5
      %p145 = por %p143, %p144
      %p147 = scmp.ne.s32.totalorder %s132, %s146
      %p148 = scmp.eq.s32.totalorder %s26, 0
      %p149 = por %p147, %p148
      %s150 = ssub.s32 %s28, %s35
      %p151 = scmp.eq.s32.totalorder %s150, 0
      %s153 = sadd.s32 %s152, 1
      %s154 = scalar_select %p151, %s152, %s153
      %p157 = pneg %p151
      %p158 = scmp.eq.s32.totalorder %s20, 5
      %p159 = por %p157, %p158
      %p160 = scmp.ne.s32.totalorder %s152, %s155
      %p161 = scmp.eq.s32.totalorder %s20, 0
      %p162 = por %p160, %p161
      %p163 = scmp.ne.s32.totalorder %s152, %s155
      %p164 = scmp.eq.s32.totalorder %s25, 5
      %p165 = por %p163, %p164
      %p166 = scmp.ne.s32.totalorder %s155, %s156
      %p167 = scmp.eq.s32.totalorder %s25, 0
      %p168 = por %p166, %p167
      %p169 = scmp.ne.s32.totalorder %s155, %s156
      %p170 = scmp.eq.s32.totalorder %s26, 5
      %p171 = por %p169, %p170
      %p173 = scmp.ne.s32.totalorder %s156, %s172
      %p174 = scmp.eq.s32.totalorder %s26, 0
      %p175 = por %p173, %p174
      %s176 = ssub.s32 %s28, %s35
      %p177 = scmp.eq.s32.totalorder %s176, 0
      %s179 = sadd.s32 %s178, 1
      %s180 = scalar_select %p177, %s178, %s179
      %p183 = pneg %p177
      %p184 = scmp.eq.s32.totalorder %s20, 5
      %p185 = por %p183, %p184
      %p186 = scmp.ne.s32.totalorder %s178, %s181
      %p187 = scmp.eq.s32.totalorder %s20, 0
      %p188 = por %p186, %p187
      %p189 = scmp.ne.s32.totalorder %s178, %s181
      %p190 = scmp.eq.s32.totalorder %s25, 5
      %p191 = por %p189, %p190
      %p192 = scmp.ne.s32.totalorder %s181, %s182
      %p193 = scmp.eq.s32.totalorder %s25, 0
      %p194 = por %p192, %p193
      %p195 = scmp.ne.s32.totalorder %s181, %s182
      %p196 = scmp.eq.s32.totalorder %s26, 5
      %p197 = por %p195, %p196
      %p199 = scmp.ne.s32.totalorder %s182, %s198
      %p200 = scmp.eq.s32.totalorder %s26, 0
      %p201 = por %p199, %p200
      %s202 = ssub.s32 %s27, %s39
      %s203 = ssub.s32 %s28, %s35
      %s204 = sor.u32 %s202, %s203
      %p205 = scmp.eq.s32.totalorder %s204, 0
      %s207 = sadd.s32 %s206, 1
      %s208 = scalar_select %p205, %s206, %s207
      %p211 = pneg %p205
      %p212 = scmp.eq.s32.totalorder %s20, 5
      %p213 = por %p211, %p212
      %p214 = scmp.ne.s32.totalorder %s206, %s209
      %p215 = scmp.eq.s32.totalorder %s20, 0
      %p216 = por %p214, %p215
      %p217 = scmp.ne.s32.totalorder %s206, %s209
      %p218 = scmp.eq.s32.totalorder %s25, 5
      %p219 = por %p217, %p218
      %p220 = scmp.ne.s32.totalorder %s209, %s210
      %p221 = scmp.eq.s32.totalorder %s25, 0
      %p222 = por %p220, %p221
      %p223 = scmp.ne.s32.totalorder %s209, %s210
      %p224 = scmp.eq.s32.totalorder %s26, 5
      %p225 = por %p223, %p224
      %p227 = scmp.ne.s32.totalorder %s210, %s226
      %p228 = scmp.eq.s32.totalorder %s26, 0
      %p229 = por %p227, %p228
      %p230 = scmp.le.s32.totalorder 1, %s20
      %p231 = scmp.lt.s32.totalorder %s20, 7
      %p232 = pnand %p230, %p231
      %p233 = pneg %p232
      // Predicated region
      $region9: #{tpu_custom_call.1} parent=5 // pred_check
        _
      $region10: #{tpu_custom_call.1} parent=5 // pred_check_branch
        %235 = sbr.rel (%p232) target = $region12
      $region11: #{tpu_custom_call.1} parent=5 // pred_region
        %s236 = ssub.s32 %s20, 1
        // Predicated region
        $region13: #{tpu_custom_call.1} parent=11 // pred_check
          %p237 = pneg %p79
        $region14: #{tpu_custom_call.1} parent=11 // pred_check_branch
          %239 = sbr.rel (%p237) target = $region16
        $region15: #{tpu_custom_call.1} parent=11 // pred_region
          %s241 = ssub.s32 512, 512
          %242 = vsyncadd [#allocation7], %s241
          %s243 = sshll.u32 [#allocation6], 4
          %s244 = int_to_ptr.vmem [resolvable:$true] %s243
          %249 = dma.hbm_to_vmem [thread:$0]  %s1, 512, %s244, [#allocation7], 128, 128, 8
        $region16: #{tpu_custom_call.1} parent=11 // pred_fallthru
          _
        // Predicated region
        $region17: #{tpu_custom_call.1} parent=11 // pred_check
          %p250 = pneg %p100
        $region18: #{tpu_custom_call.1} parent=11 // pred_check_branch
          %252 = sbr.rel (%p250) target = $region20
        $region19: #{tpu_custom_call.1} parent=11 // pred_region
          _
        $region20: #{tpu_custom_call.1} parent=11 // pred_fallthru
          _
        // Predicated region
        $region21: #{tpu_custom_call.1} parent=11 // pred_check
          %p253 = pneg %p121
        $region22: #{tpu_custom_call.1} parent=11 // pred_check_branch
          %255 = sbr.rel (%p253) target = $region24
        $region23: #{tpu_custom_call.1} parent=11 // pred_region
          _
        $region24: #{tpu_custom_call.1} parent=11 // pred_fallthru
          _
        // Predicated region
        $region25: #{tpu_custom_call.1} parent=11 // pred_check
          %p256 = pneg %p142
        $region26: #{tpu_custom_call.1} parent=11 // pred_check_branch
          %258 = sbr.rel (%p256) target = $region28
        $region27: #{tpu_custom_call.1} parent=11 // pred_region
          _
        $region28: #{tpu_custom_call.1} parent=11 // pred_fallthru
          _
      $region12: #{tpu_custom_call.1} parent=5 // pred_fallthru
        _
      %p259 = scmp.lt.s32.totalorder %s20, 6
      // Predicated region
      $region29: #{tpu_custom_call.1} parent=5 // pred_check
        %p260 = pneg %p259
      $region30: #{tpu_custom_call.1} parent=5 // pred_check_branch
        %262 = sbr.rel (%p260) target = $region32
      $region31: #{tpu_custom_call.1} parent=5 // pred_region
        // Predicated region
        $region33: #{tpu_custom_call.1} parent=31 // pred_check
          %p263 = pneg %p52
        $region34: #{tpu_custom_call.1} parent=31 // pred_check_branch
          %265 = sbr.rel (%p263) target = $region36
        $region35: #{tpu_custom_call.1} parent=31 // pred_region
          %s266 = sand.u32 %s20, 1
          %s267 = scalar_lea.sflag [#allocation4], %s266
          %s268 = sand.u32 %s42, 1
          %s269 = smul.addr %s268, 8
          %s270 = scalar_lea.vmem [#allocation3], %s269
          %s272 = ssub.s32 128, 128
          %273 = vsyncadd %s267, %s272
          %s274 = smul.addr %s27, 128
          %s275 = scalar_lea.hbm %s0, %s274
          %s277 = sshll.u32 %s270, 4
          %s278 = int_to_ptr.vmem [resolvable:$true] %s277
          %280 = dma.hbm_to_vmem [thread:$0]  %s275, 128, %s278, %s267
        $region36: #{tpu_custom_call.1} parent=31 // pred_fallthru
          _
        // Predicated region
        $region37: #{tpu_custom_call.1} parent=31 // pred_check
          %p281 = pneg %p162
        $region38: #{tpu_custom_call.1} parent=31 // pred_check_branch
          %283 = sbr.rel (%p281) target = $region40
        $region39: #{tpu_custom_call.1} parent=31 // pred_region
          %s284 = sand.u32 %s20, 1
          %s285 = scalar_lea.sflag [#allocation4], %s284
          %s286 = sand.u32 %s152, 1
          %s287 = smul.addr %s286, 32
          %s288 = scalar_lea.vmem [#allocation8], %s287
          %s290 = ssub.s32 512, 512
          %291 = vsyncadd %s285, %s290
          %s292 = smul.addr %s28, 128
          %s293 = scalar_lea.hbm %s5, %s292
          %s294 = sshll.u32 %s288, 4
          %s295 = int_to_ptr.vmem [resolvable:$true] %s294
          %300 = dma.hbm_to_vmem [thread:$0]  %s293, 512, %s295, %s285, 384, 128, 8
        $region40: #{tpu_custom_call.1} parent=31 // pred_fallthru
          _
        // Predicated region
        $region41: #{tpu_custom_call.1} parent=31 // pred_check
          %p301 = pneg %p188
        $region42: #{tpu_custom_call.1} parent=31 // pred_check_branch
          %303 = sbr.rel (%p301) target = $region44
        $region43: #{tpu_custom_call.1} parent=31 // pred_region
          %p304 = scmp.lt.s32.totalorder %s28, 2
          %s305 = scalar_select %p304, %s28, 2
          %s306 = scalar_lea.vmem %s6, %s305
        $region44: #{tpu_custom_call.1} parent=31 // pred_fallthru
          _
      $region32: #{tpu_custom_call.1} parent=5 // pred_fallthru
        _
      %p307 = scmp.le.s32.totalorder 1, %s20
      %p308 = scmp.lt.s32.totalorder %s20, 7
      %p309 = pnand %p307, %p308
      %p310 = pneg %p309
      // Predicated region
      $region45: #{tpu_custom_call.1} parent=5 // pred_check
        _
      $region46: #{tpu_custom_call.1} parent=5 // pred_check_branch
        %312 = sbr.rel (%p309) target = $region48
      $region47: #{tpu_custom_call.1} parent=5 // pred_region
        %s313 = ssub.s32 %s20, 1
        %s314 = sand.u32 %s25, 1
        %s315 = scalar_lea.sflag [#allocation4], %s314
        %s316 = sand.u32 %s45, 1
        %s317 = smul.addr %s316, 8
        %s318 = scalar_lea.vmem [#allocation3], %s317
        // Predicated region
        $region49: #{tpu_custom_call.1} parent=47 // pred_check
          %p319 = pneg %p58
        $region50: #{tpu_custom_call.1} parent=47 // pred_check_branch
          %321 = sbr.rel (%p319) target = $region52
        $region51: #{tpu_custom_call.1} parent=47 // pred_region
          %322 = dma.done %s315, 128
        $region52: #{tpu_custom_call.1} parent=47 // pred_fallthru
          _
        // Predicated region
        $region53: #{tpu_custom_call.1} parent=47 // pred_check
          %p323 = pneg %p79
        $region54: #{tpu_custom_call.1} parent=47 // pred_check_branch
          %325 = sbr.rel (%p323) target = $region56
        $region55: #{tpu_custom_call.1} parent=47 // pred_region
          %326 = dma.done [#allocation7], 512
        $region56: #{tpu_custom_call.1} parent=47 // pred_fallthru
          _
        %s327 = sand.u32 %s25, 1
        %s328 = scalar_lea.sflag [#allocation4], %s327
        %s329 = sand.u32 %s155, 1
        %s330 = smul.addr %s329, 32
        %s331 = scalar_lea.vmem [#allocation8], %s330
        // Predicated region
        $region57: #{tpu_custom_call.1} parent=47 // pred_check
          %p332 = pneg %p168
        $region58: #{tpu_custom_call.1} parent=47 // pred_check_branch
          %334 = sbr.rel (%p332) target = $region60
        $region59: #{tpu_custom_call.1} parent=47 // pred_region
          %335 = dma.done %s328, 512
        $region60: #{tpu_custom_call.1} parent=47 // pred_fallthru
          _
        %s336 = sand.u32 %s25, 1
        %s337 = scalar_lea.sflag [#allocation4], %s336
        %s338 = sand.u32 %s45, 1
        %s339 = smul.addr %s338, 8
        %s340 = scalar_lea.vmem [#allocation3], %s339
        %p341 = pneg %p58
        %p342 = pneg %p55
        %p343 = pneg %p79
        %p344 = pneg %p76
        %p345 = pneg %p100
        %p346 = pneg %p97
        %p347 = pneg %p121
        %p348 = pneg %p118
        %p349 = pneg %p142
        %p350 = pneg %p139
        %s351 = sand.u32 %s25, 1
        %s352 = scalar_lea.sflag [#allocation4], %s351
        %s353 = sand.u32 %s155, 1
        %s354 = smul.addr %s353, 32
        %s355 = scalar_lea.vmem [#allocation8], %s354
        %p356 = pneg %p168
        %p357 = pneg %p165
        %p358 = scmp.lt.s32.totalorder %s30, 2
        %s359 = scalar_select %p358, %s30, 2
        %s360 = scalar_lea.vmem %s6, %s359
        %p361 = pneg %p194
        %p362 = pneg %p191
        %p363 = pneg %p222
        %p364 = pneg %p219
        %s365 = sand.u32 %s209, 1
        %s366 = scalar_lea.sflag [#allocation5], %s365
        %s367 = sand.u32 %s209, 1
        %s368 = smul.addr %s367, 8
        %s369 = scalar_lea.vmem [#allocation9], %s368
        %p370 = scmp.lt.s32.totalorder %s30, 2
        %s371 = scalar_select %p370, %s30, 2
        %s372 = scalar_lea.vmem %s6, %s371
        %p373 = scmp.eq.s32.totalorder %s30, 0
        // Predicated region
        $region61: #{tpu_custom_call.1} parent=47 // pred_check
          %p374 = pneg %p373
        $region62: #{tpu_custom_call.1} parent=47 // pred_check_branch
          %376 = sbr.rel (%p374) target = $region64
        $region63: #{tpu_custom_call.1} parent=47 // pred_region
          %v377 = vld [vmem:[%s318] sm:$0xff]
          %v378 = vld [vmem:[#allocation6] sm:$0xff]
          %v379 = vld [vmem:[#allocation6 + $0x8] sm:$0xff]
          %v380 = vld [vmem:[#allocation6 + $0x10] sm:$0xff]
          %v381 = vld [vmem:[#allocation6 + $0x18] sm:$0xff]
          %v382 = vld [vmem:[%s2] sm:$0x1]
          %v384 = vlaneseq
          %v385 = vshrl.u32 %v384, 7
          %v386 = vsub.s32 0, %v385
          %v387 = vrot.slane %v382, %v386
          %vm389 = vcmask 261120
          %v391 = vsel %vm389, %v377, 0
          %393 = vmatprep.subr.mxu0 0.0
          %394 = vmatpush1.msra.mxu0 %v378
          %395 = vmatprep.subr.mxu0 0.0
          %396 = vmatpush1.msra.mxu0 %v379
          %397 = vmatprep.subr.mxu0 0.0
          %398 = vmatpush1.msra.mxu0 %v380
          %399 = vmatprep.subr.mxu0 0.0
          %400 = vmatpush1.msra.mxu0 %v381
          %401 = vmatprep.subr.mxu0 0.0
          %402 = vmatpush1.msra.mxu0 0.0
          %403 = vmatprep.subr.mxu0 0.0
          %404 = vmatpush1.msra.mxu0 0.0
          %405 = vmatprep.subr.mxu0 0.0
          %406 = vmatpush1.msra.mxu0 0.0
          %407 = vmatprep.subr.mxu0 0.0
          %408 = vmatpush1.msra.mxu0 0.0
          %409 = vmatprep.subr.mxu0 0.0
          %410 = vmatpush1.msra.mxu0 0.0
          %411 = vmatprep.subr.mxu0 0.0
          %412 = vmatpush1.msra.mxu0 0.0
          %413 = vmatprep.subr.mxu0 0.0
          %414 = vmatpush1.msra.mxu0 0.0
          %415 = vmatprep.subr.mxu0 0.0
          %416 = vmatpush1.msra.mxu0 0.0
          %417 = vmatprep.subr.mxu0 0.0
          %418 = vmatpush1.msra.mxu0 0.0
          %419 = vmatprep.subr.mxu0 0.0
          %420 = vmatpush1.msra.mxu0 0.0
          %421 = vmatprep.subr.mxu0 0.0
          %422 = vmatpush1.msra.mxu0 0.0
          %423 = vmatprep.subr.mxu0 0.0
          %424 = vmatpush1.msra.mxu0 0.0
          %425 = vmatprep.subr.mxu0 0.0
          %426 = vmatpush1.msra.mxu0 0.0
          %427 = vmatprep.subr.mxu0 0.0
          %428 = vmatpush1.msra.mxu0 0.0
          %429 = vmatprep.subr.mxu0 0.0
          %430 = vmatpush1.msra.mxu0 0.0
          %431 = vmatprep.subr.mxu0 0.0
          %432 = vmatpush1.msra.mxu0 0.0
          %433 = vmatprep.subr.mxu0 0.0
          %434 = vmatpush1.msra.mxu0 0.0
          %435 = vmatprep.subr.mxu0 0.0
          %436 = vmatpush1.msra.mxu0 0.0
          %437 = vmatprep.subr.mxu0 0.0
          %438 = vmatpush1.msra.mxu0 0.0
          %439 = vmatprep.subr.mxu0 0.0
          %440 = vmatpush1.msra.mxu0 0.0
          %441 = vmatprep.subr.mxu0 0.0
          %442 = vmatpush1.msra.mxu0 0.0
          %443 = vmatprep.subr.mxu0 0.0
          %444 = vmatpush1.msra.mxu0 0.0
          %445 = vmatprep.subr.mxu0 0.0
          %446 = vmatpush1.msra.mxu0 0.0
          %447 = vmatprep.subr.mxu0 0.0
          %448 = vmatpush1.msra.mxu0 0.0
          %449 = vmatprep.subr.mxu0 0.0
          %450 = vmatpush1.msra.mxu0 0.0
          %451 = vmatprep.subr.mxu0 0.0
          %452 = vmatpush1.msra.mxu0 0.0
          %453 = vmatprep.subr.mxu0 0.0
          %454 = vmatpush1.msra.mxu0 0.0
          %455 = vmatprep.subr.mxu0 0.0
          %456 = vmatpush1.msra.mxu0 0.0
          %457 = vmatprep.mubr.f32.mxu0 0.0
          %458 = vmatmul.mubr.f32.gmra.mrb[0].mxu0 %v391
          %v459 = vpop.f32.mrb[0].mxu0
          %v460 = vadd.f32 %v387, %v459
          %v461 = vpop.f32.mrb[0].mxu0
          %462 = vdwg.mxu0
          %v463 = vmul.f32 %v460, 0.5
          %v464 = vmul.f32 %v460, 0.70710677
          %v465 = verf.f32.pop %v464
          %v466 = vadd.f32 %v465, 1.0
          %v467 = vmul.f32 %v463, %v466
          %v468 = vsel %vm389, %v467, 0.0
          %469 = vadd.xlane.f32.xlu0 %v468
          %v470 = vpop.xlane.xlu0 %469
          %v471 = vrcp.pop 32.0
          %v472 = vmul.f32 %v470, %v471
          %v473 = vmul.f32 %v467, %v467
          %v474 = vsel %vm389, %v473, 0.0
          %475 = vadd.xlane.f32.xlu0 %v474
          %v476 = vpop.xlane.xlu0 %475
          %v477 = vmul.f32 %v476, %v471
          %v478 = vmul.f32 %v472, %v472
          %v479 = vsub.f32 %v477, %v478
          %v480 = vmax.f32 %v479, 0.0
          %v481 = vsub.f32 %v467, %v472
          %v482 = vadd.f32 %v480, 1e-05
          %v483 = vrsqrt.pop %v482
          %v484 = vmul.f32 %v481, %v483
          %v485 = vld [vmem:[%s3] sm:$0x1]
          %v487 = vlaneseq
          %v488 = vshrl.u32 %v487, 7
          %v489 = vsub.s32 0, %v488
          %v490 = vrot.slane %v485, %v489
          %v492 = vmul.f32 %v484, %v490
          %v493 = vld [vmem:[%s4] sm:$0x1]
          %v495 = vlaneseq
          %v496 = vshrl.u32 %v495, 7
          %v497 = vsub.s32 0, %v496
          %v498 = vrot.slane %v493, %v497
          %v500 = vadd.f32 %v492, %v498
          %501 = vst.msk [vmem:[#allocation2] sm:$0xff] %vm389, %v500
        $region64: #{tpu_custom_call.1} parent=47 // pred_fallthru
          _
        %v502 = vld [vmem:[#allocation2] sm:$0xff]
        %v503 = vld [vmem:[%s331] sm:$0xff]
        %v504 = vld [vmem:[%s331 + $0x8] sm:$0xff]
        %v505 = vld [vmem:[%s331 + $0x10] sm:$0xff]
        %v506 = vld [vmem:[%s331 + $0x18] sm:$0xff]
        %v507 = vld [vmem:[%s372] sm:$0x1]
        %v509 = vlaneseq
        %v510 = vshrl.u32 %v509, 7
        %v511 = vsub.s32 0, %v510
        %v512 = vrot.slane %v507, %v511
        %vm514 = vcmask 261120
        %v516 = vsel %vm514, %v502, 0
        %518 = vmatprep.subr.mxu0 0.0
        %519 = vmatpush1.msra.mxu0 %v503
        %520 = vmatprep.subr.mxu0 0.0
        %521 = vmatpush1.msra.mxu0 %v504
        %522 = vmatprep.subr.mxu0 0.0
        %523 = vmatpush1.msra.mxu0 %v505
        %524 = vmatprep.subr.mxu0 0.0
        %525 = vmatpush1.msra.mxu0 %v506
        %526 = vmatprep.subr.mxu0 0.0
        %527 = vmatpush1.msra.mxu0 0.0
        %528 = vmatprep.subr.mxu0 0.0
        %529 = vmatpush1.msra.mxu0 0.0
        %530 = vmatprep.subr.mxu0 0.0
        %531 = vmatpush1.msra.mxu0 0.0
        %532 = vmatprep.subr.mxu0 0.0
        %533 = vmatpush1.msra.mxu0 0.0
        %534 = vmatprep.subr.mxu0 0.0
        %535 = vmatpush1.msra.mxu0 0.0
        %536 = vmatprep.subr.mxu0 0.0
        %537 = vmatpush1.msra.mxu0 0.0
        %538 = vmatprep.subr.mxu0 0.0
        %539 = vmatpush1.msra.mxu0 0.0
        %540 = vmatprep.subr.mxu0 0.0
        %541 = vmatpush1.msra.mxu0 0.0
        %542 = vmatprep.subr.mxu0 0.0
        %543 = vmatpush1.msra.mxu0 0.0
        %544 = vmatprep.subr.mxu0 0.0
        %545 = vmatpush1.msra.mxu0 0.0
        %546 = vmatprep.subr.mxu0 0.0
        %547 = vmatpush1.msra.mxu0 0.0
        %548 = vmatprep.subr.mxu0 0.0
        %549 = vmatpush1.msra.mxu0 0.0
        %550 = vmatprep.subr.mxu0 0.0
        %551 = vmatpush1.msra.mxu0 0.0
        %552 = vmatprep.subr.mxu0 0.0
        %553 = vmatpush1.msra.mxu0 0.0
        %554 = vmatprep.subr.mxu0 0.0
        %555 = vmatpush1.msra.mxu0 0.0
        %556 = vmatprep.subr.mxu0 0.0
        %557 = vmatpush1.msra.mxu0 0.0
        %558 = vmatprep.subr.mxu0 0.0
        %559 = vmatpush1.msra.mxu0 0.0
        %560 = vmatprep.subr.mxu0 0.0
        %561 = vmatpush1.msra.mxu0 0.0
        %562 = vmatprep.subr.mxu0 0.0
        %563 = vmatpush1.msra.mxu0 0.0
        %564 = vmatprep.subr.mxu0 0.0
        %565 = vmatpush1.msra.mxu0 0.0
        %566 = vmatprep.subr.mxu0 0.0
        %567 = vmatpush1.msra.mxu0 0.0
        %568 = vmatprep.subr.mxu0 0.0
        %569 = vmatpush1.msra.mxu0 0.0
        %570 = vmatprep.subr.mxu0 0.0
        %571 = vmatpush1.msra.mxu0 0.0
        %572 = vmatprep.subr.mxu0 0.0
        %573 = vmatpush1.msra.mxu0 0.0
        %574 = vmatprep.subr.mxu0 0.0
        %575 = vmatpush1.msra.mxu0 0.0
        %576 = vmatprep.subr.mxu0 0.0
        %577 = vmatpush1.msra.mxu0 0.0
        %578 = vmatprep.subr.mxu0 0.0
        %579 = vmatpush1.msra.mxu0 0.0
        %580 = vmatprep.subr.mxu0 0.0
        %581 = vmatpush1.msra.mxu0 0.0
        %582 = vmatprep.mubr.f32.mxu0 0.0
        %583 = vmatmul.mubr.f32.gmra.mrb[0].mxu0 %v516
        %v584 = vpop.f32.mrb[0].mxu0
        %v585 = vadd.f32 %v512, %v584
        %v586 = vpop.f32.mrb[0].mxu0
        %587 = vdwg.mxu0
        %588 = vst [vmem:[%s369] sm:$0xff] %v585
        %s589 = sand.u32 %s209, 1
        %s590 = scalar_lea.sflag [#allocation5], %s589
        %s591 = sand.u32 %s209, 1
        %s592 = smul.addr %s591, 8
        %s593 = scalar_lea.vmem [#allocation9], %s592
        // Predicated region
        $region65: #{tpu_custom_call.1} parent=47 // pred_check
          %p594 = pneg %p219
        $region66: #{tpu_custom_call.1} parent=47 // pred_check_branch
          %596 = sbr.rel (%p594) target = $region68
        $region67: #{tpu_custom_call.1} parent=47 // pred_region
          %s598 = ssub.s32 128, 128
          %599 = vsyncadd %s590, %s598
          %s600 = smul.addr %s29, 3
          %s601 = sadd.s32 %s30, %s600
          %s602 = smul.addr %s601, 128
          %s603 = scalar_lea.hbm %s7, %s602
          %s605 = sshll.u32 %s593, 4
          %s606 = int_to_ptr.vmem [resolvable:$true] %s605
          %608 = dma.vmem_to_hbm [thread:$0]  %s606, 128, %s603, %s590
        $region68: #{tpu_custom_call.1} parent=47 // pred_fallthru
          _
      $region48: #{tpu_custom_call.1} parent=5 // pred_fallthru
        _
      %p609 = scmp.le.s32.totalorder 2, %s20
      // Predicated region
      $region69: #{tpu_custom_call.1} parent=5 // pred_check
        %p610 = pneg %p609
      $region70: #{tpu_custom_call.1} parent=5 // pred_check_branch
        %612 = sbr.rel (%p610) target = $region72
      $region71: #{tpu_custom_call.1} parent=5 // pred_region
        %s613 = ssub.s32 %s20, 2
        // Predicated region
        $region73: #{tpu_custom_call.1} parent=71 // pred_check
          %p614 = pneg %p225
        $region74: #{tpu_custom_call.1} parent=71 // pred_check_branch
          %616 = sbr.rel (%p614) target = $region76
        $region75: #{tpu_custom_call.1} parent=71 // pred_region
          %s617 = sand.u32 %s210, 1
          %s618 = scalar_lea.sflag [#allocation5], %s617
          %s619 = sand.u32 %s210, 1
          %s620 = smul.addr %s619, 8
          %s621 = scalar_lea.vmem [#allocation9], %s620
          %622 = dma.done %s618, 128
        $region76: #{tpu_custom_call.1} parent=71 // pred_fallthru
          _
      $region72: #{tpu_custom_call.1} parent=5 // pred_fallthru
        _
    $region6: #{tpu_custom_call.1} parent=1 // loop_footer
      %s24 = sadd.s32 1, %s20
    $region7: #{tpu_custom_call.1} parent=1 // loop_footer_branch
      %19 = sbr.rel target = $region3
    $region8: #{tpu_custom_call.1} parent=1 // loop_exit
      _
    %623 = vsyncpa [#allocation4], 1
    %s624 = scalar_lea.sflag [#allocation4], 1
    %625 = vsyncpa %s624, 1
    %626 = vsyncpa [#allocation7], 1
    %627 = vsyncpa [#allocation5], 1
    %s628 = scalar_lea.sflag [#allocation5], 1
    %629 = vsyncpa %s628, 1

</llo_original>
